<compile_context>
chip_gen: v7x
topology: tpu7x:2x2x1
jax: 0.10.0
libtpu: 0.0.40
codegen_flags: <defaults>
</compile_context>

<pallas_src>
import functools
import math

import jax
import jax.numpy as jnp
import numpy as np
from jax.experimental import pallas as pl
from jax.experimental.pallas import tpu as pltpu


# --------------------------------------------------------------------------- #
# Small helpers                                                               #
# --------------------------------------------------------------------------- #
def _choose_tile(s: int, cap: int) -> int:
    """Largest tile <= cap that divides s (multiple of 8); else the full dim."""
    if s <= cap:
        return s
    t = (cap // 8) * 8
    while t >= 8:
        if s % t == 0:
            return t
        t -= 8
    # TODO(synk): prime-ish s falls back to a single full-sequence tile; a
    # remainder-masking path would be needed for very long, non-divisible S.
    return s


def _choose_lane_tile(dim: int, cap: int) -> int:
    """Largest multiple of 128 <= cap dividing dim; else the full dim."""
    if dim <= cap:
        return dim
    t = (cap // 128) * 128
    while t >= 128:
        if dim % t == 0:
            return t
        t -= 128
    return dim


def _tpu_generation():
    """Best-effort hardware query (device kind, VMEM capacity)."""
    kind = ""
    try:
        kind = jax.devices()[0].device_kind.lower()
    except Exception:
        pass
    vmem_cap = 128 * 1024 * 1024
    try:
        info = pltpu.get_tpu_info()
        vmem_cap = int(getattr(info, "vmem_capacity_bytes", vmem_cap))
    except Exception:
        pass
    is_v5e = ("v5e" in kind) or ("v5 lite" in kind) or ("v5litepod" in kind)
    return kind, vmem_cap, is_v5e


# --------------------------------------------------------------------------- #
# Kernel 1: fused QKV projection (weight streamed over 3H column tiles)       #
# --------------------------------------------------------------------------- #
def _qkv_proj_kernel(x_ref, wqkv_ref, bqkv_ref, qkv_ref):
    """x_ref: (TS, H) f32; wqkv_ref: (H, TN) bf16; bqkv_ref: (1, TN) f32;
    qkv_ref: (TS, TN) bf16 column tile of the packed (B,S,3H) qkv buffer."""
    x = x_ref[...].astype(jnp.bfloat16)                              # (TS, H)
    acc = jnp.dot(x, wqkv_ref[...],
                  preferred_element_type=jnp.float32)                # MXU, f32 acc
    qkv_ref[...] = (acc + bqkv_ref[...]).astype(qkv_ref.dtype)       # q pre-scaled


# --------------------------------------------------------------------------- #
# Kernel 2: flash attention + fused output projection                         #
# --------------------------------------------------------------------------- #
def _flash_attn_kernel(q_ref, k_ref, v_ref, wo_ref, bo_ref, o_ref,
                       m_sc, l_sc, acc_sc, ctx_sc, *,
                       num_heads: int, head_dim: int, bf16_exp: bool):
    """q_ref: (TQ, H) bf16 (pre-scaled), k/v_ref: (TK, H) bf16,
    wo_ref: (H, H) bf16, bo_ref: (1, H) f32, o_ref: (TQ, H).
    Scratch: m_sc/l_sc (TQ, nH) f32, acc_sc (nH, TQ, D) f32, ctx_sc (TQ, H) bf16."""
    ki = pl.program_id(2)

    @pl.when(ki == 0)
    def _init():
        m_sc[...] = jnp.full(m_sc.shape, -jnp.inf, dtype=m_sc.dtype)
        l_sc[...] = jnp.zeros(l_sc.shape, l_sc.dtype)
        acc_sc[...] = jnp.zeros(acc_sc.shape, acc_sc.dtype)

    # TODO(synk): for very large num_heads, promote heads to a grid axis (or a
    # fori_loop over D-wide slabs) to bound live ranges; the static unroll is
    # fine at the head counts exercised here.
    for h in range(num_heads):
        lo = h * head_dim
        hi = lo + head_dim
        qh = q_ref[:, lo:hi]                                         # (TQ, D) bf16
        kh = k_ref[:, lo:hi]                                         # (TK, D) bf16
        vh = v_ref[:, lo:hi]                                         # (TK, D) bf16

        # Contract head dims directly — no explicit kh.T (no XLU transpose).
        s = jax.lax.dot_general(qh, kh, (((1,), (1,)), ((), ())),
                                preferred_element_type=jnp.float32)  # (TQ, TK) f32

        m_prev = m_sc[:, h:h + 1]                                    # (TQ, 1) f32
        m_new = jnp.maximum(m_prev, jnp.max(s, axis=-1, keepdims=True))
        alpha = jnp.exp(m_prev - m_new)                              # f32
        if bf16_exp:
            # bf16 EUP exp on v6e/v7x; p is cast to bf16 for the PV matmul anyway.
            p = jnp.exp((s - m_new).astype(jnp.bfloat16))            # (TQ, TK) bf16
            p_sum = jnp.sum(p.astype(jnp.float32), axis=-1, keepdims=True)
            p_mx = p
        else:
            p = jnp.exp(s - m_new)                                   # f32 (v5e)
            p_sum = jnp.sum(p, axis=-1, keepdims=True)
            p_mx = p.astype(jnp.bfloat16)
        l_sc[:, h:h + 1] = alpha * l_sc[:, h:h + 1] + p_sum
        pv = jnp.dot(p_mx, vh, preferred_element_type=jnp.float32)   # (TQ, D) f32
        acc_sc[h] = alpha * acc_sc[h] + pv
        m_sc[:, h:h + 1] = m_new

    @pl.when(ki == pl.num_programs(2) - 1)
    def _finalize():
        # Pack normalized heads into one (TQ, H) bf16 slab, then a single
        # K=H output-projection matmul (full MXU depth, one accumulator).
        for h in range(num_heads):
            lo = h * head_dim
            hi = lo + head_dim
            inv_l = pl.reciprocal(l_sc[:, h:h + 1], approx=True)     # EUP slot
            ctx_sc[:, lo:hi] = (acc_sc[h] * inv_l).astype(ctx_sc.dtype)
        out = jnp.dot(ctx_sc[...], wo_ref[...],
                      preferred_element_type=jnp.float32)            # (TQ, H) f32
        o_ref[...] = (out + bo_ref[...]).astype(o_ref.dtype)
    # TODO(synk): dropout is identity in eval mode; attention_mask / KV cache
    # (use_cache) / 'sparse' and 'flash'-library backends are not exercised here.


# --------------------------------------------------------------------------- #
# Wrapper                                                                     #
# --------------------------------------------------------------------------- #
def efficient_attention(hidden_states, params, *, num_heads: int, out_dtype=None):
    """hidden_states: (B, S, H). Returns (B, S, H) in out_dtype (default: input dtype)."""
    B, S, H = hidden_states.shape
    assert H % num_heads == 0
    D = H // num_heads
    scale = 1.0 / math.sqrt(D)
    out_dtype = hidden_states.dtype if out_dtype is None else out_dtype

    # Generation-aware budgets.
    _, vmem_cap, is_v5e = _tpu_generation()
    is_v7x_class = vmem_cap <= 64 * 1024 * 1024
    if is_v7x_class:
        q_cap, kv_cap, n_cap, limit_cap = 256, 256, 512, 48 * 1024 * 1024
    else:
        q_cap, kv_cap, n_cap, limit_cap = 512, 512, 1024, 100 * 1024 * 1024
    bf16_exp = not is_v5e    # v5e has no bf16 EUP

    # Fused projection params; 1/sqrt(D) folded into the Q weight/bias.
    # (In a real model these would be precomputed once at parameter load time.)
    wqkv = jnp.concatenate(
        [params["wq"] * scale, params["wk"], params["wv"]], axis=1
    ).astype(jnp.bfloat16)                                           # (H, 3H) bf16
    bqkv = jnp.concatenate(
        [params["bq"] * scale, params["bk"], params["bv"]], axis=1
    ).astype(jnp.float32)                                            # (1, 3H) f32
    wo = params["wo"].astype(jnp.bfloat16)                           # (H, H) bf16
    bo = params["bo"].astype(jnp.float32)                            # (1, H) f32

    # ---- Kernel 1: fused QKV projection, weight streamed in column tiles ----
    TS = _choose_tile(S, 256)
    TN = _choose_lane_tile(3 * H, n_cap)
    est1 = 2 * (TS * H * 4 + H * TN * 2 + TS * TN * 2) + 3 * H * 8
    vlim1 = None if est1 <= 24 * 1024 * 1024 else min(est1 + est1 // 2, limit_cap)

    qkv = pl.pallas_call(
        _qkv_proj_kernel,
        out_shape=jax.ShapeDtypeStruct((B, S, 3 * H), jnp.bfloat16),
        grid_spec=pltpu.PrefetchScalarGridSpec(
            num_scalar_prefetch=0,
            grid=(B, S // TS, (3 * H) // TN),
            in_specs=[
                pl.BlockSpec((None, TS, H), lambda b, si, ni: (b, si, 0)),   # x
                pl.BlockSpec((H, TN), lambda b, si, ni: (0, ni)),            # wqkv tile
                pl.BlockSpec((1, TN), lambda b, si, ni: (0, ni)),            # bqkv tile
            ],
            out_specs=pl.BlockSpec((None, TS, TN), lambda b, si, ni: (b, si, ni)),
        ),
        compiler_params=pltpu.CompilerParams(
            dimension_semantics=("parallel", "parallel", "arbitrary"),
            vmem_limit_bytes=vlim1),
    )(hidden_states, wqkv, bqkv)

    # ---- Kernel 2: flash attention + fused output projection ----------------
    TQ = _choose_tile(S, q_cap)
    TK = _choose_tile(S, kv_cap)

    if H % 128 == 0:
        # Read q/k/v directly as lane-aligned column-block views of packed qkv.
        q_arr = k_arr = v_arr = qkv
        cq, ck, cv = 0, 1, 2
    else:
        # Toy/small hidden sizes: H-wide column views would violate lane tiling,
        # so slice in the wrapper (negligible at these shapes).
        q_arr = qkv[:, :, 0:H]
        k_arr = qkv[:, :, H:2 * H]
        v_arr = qkv[:, :, 2 * H:3 * H]
        cq = ck = cv = 0

    attn_kernel = functools.partial(_flash_attn_kernel, num_heads=num_heads,
                                    head_dim=D, bf16_exp=bf16_exp)
    out_isz = jnp.dtype(out_dtype).itemsize
    est2 = (2 * TQ * H * 2            # q (double-buffered, bf16)
            + 4 * TK * H * 2          # k, v (double-buffered)
            + H * H * 2 + 8 * H * 4   # wo (single-buffered) + bo
            + 2 * TQ * H * out_isz    # output block
            + 2 * TQ * 128 * 4        # m, l scratch (lane-padded)
            + TQ * H * 4              # per-head acc scratch
            + TQ * H * 2)             # packed bf16 ctx scratch
    vlim2 = None if est2 <= 24 * 1024 * 1024 else min(est2 + est2 // 2, limit_cap)

    def attn_call(single_buffer_weights: bool):
        # Constant-index wo/bo: single-buffer them (double-buffering a resident
        # 32 MiB wo at H=4096 would blow v7x's 64 MiB VMEM for nothing).
        wkw = dict(pipeline_mode=pl.Buffered(1)) if single_buffer_weights else {}
        return pl.pallas_call(
            attn_kernel,
            out_shape=jax.ShapeDtypeStruct((B, S, H), out_dtype),
            grid_spec=pltpu.PrefetchScalarGridSpec(
                num_scalar_prefetch=0,
                grid=(B, S // TQ, S // TK),
                in_specs=[
                    pl.BlockSpec((None, TQ, H), lambda b, qi, ki, c=cq: (b, qi, c)),
                    pl.BlockSpec((None, TK, H), lambda b, qi, ki, c=ck: (b, ki, c)),
                    pl.BlockSpec((None, TK, H), lambda b, qi, ki, c=cv: (b, ki, c)),
                    pl.BlockSpec((H, H), lambda b, qi, ki: (0, 0), **wkw),      # wo
                    pl.BlockSpec((1, H), lambda b, qi, ki: (0, 0), **wkw),      # bo
                ],
                out_specs=pl.BlockSpec((None, TQ, H),
                                       lambda b, qi, ki: (b, qi, 0)),
                scratch_shapes=[
                    pltpu.VMEM((TQ, num_heads), jnp.float32),      # running max m
                    pltpu.VMEM((TQ, num_heads), jnp.float32),      # running sum l
                    pltpu.VMEM((num_heads, TQ, D), jnp.float32),   # unnormalized ctx
                    pltpu.VMEM((TQ, H), jnp.bfloat16),             # packed ctx
                ],
            ),
            compiler_params=pltpu.CompilerParams(
                dimension_semantics=("parallel", "parallel", "arbitrary"),
                vmem_limit_bytes=vlim2),
        )(q_arr, k_arr, v_arr, wo, bo)

    try:
        out = attn_call(True)
        jax.block_until_ready(out)
    except Exception:
        # Fall back to default (double-buffered) weight specs if this JAX build
        # rejects single-buffered pipeline_mode.
        out = attn_call(False)
    return out


# --------------------------------------------------------------------------- #
# Pure-JAX f32 reference (memory_efficient path, eval mode, no mask)          #
# --------------------------------------------------------------------------- #
def _reference(hidden_states, params, *, num_heads: int):
    B, S, H = hidden_states.shape
    D = H // num_heads
    x = hidden_states
    q = x @ params["wq"] + params["bq"][0]
    k = x @ params["wk"] + params["bk"][0]
    v = x @ params["wv"] + params["bv"][0]
    q = q.reshape(B, S, num_heads, D).transpose(0, 2, 1, 3) * (D ** -0.5)
    k = k.reshape(B, S, num_heads, D).transpose(0, 2, 1, 3)
    v = v.reshape(B, S, num_heads, D).transpose(0, 2, 1, 3)
    w = jax.nn.softmax(q @ jnp.swapaxes(k, -1, -2), axis=-1)
    ctx = (w @ v).transpose(0, 2, 1, 3).reshape(B, S, H)
    return ctx @ params["wo"] + params["bo"][0]


def init_params(key, hidden_size):
    """Deterministic synthetic weights; layout [in, out] for x @ W + b."""
    ks = jax.random.split(key, 8)
    scale = 1.0 / math.sqrt(hidden_size)

    def w(k):
        return (jax.random.uniform(k, (hidden_size, hidden_size),
                                   jnp.float32, -1.0, 1.0) * scale)

    def b(k):
        return (jax.random.uniform(k, (1, hidden_size),
                                   jnp.float32, -1.0, 1.0) * scale)

    return {
        "wq": w(ks[0]), "bq": b(ks[1]),
        "wk": w(ks[2]), "bk": b(ks[3]),
        "wv": w(ks[4]), "bv": b(ks[5]),
        "wo": w(ks[6]), "bo": b(ks[7]),
    }


if __name__ == "__main__":
    batch, seq_len, hidden_size, num_heads = 2, 8, 32, 4

    key = jax.random.PRNGKey(0)
    k_x, k_p = jax.random.split(key)
    hidden_states = jax.random.normal(k_x, (batch, seq_len, hidden_size), jnp.float32)
    params = init_params(k_p, hidden_size)

    out = efficient_attention(hidden_states, params, num_heads=num_heads)
    out = jax.block_until_ready(out)

    # bf16 MXU operands, bf16 exp (v6e/v7x) and an approximate EUP reciprocal →
    # compare against the pure-f32 reference with bf16-appropriate tolerance.
    ref = _reference(hidden_states, params, num_heads=num_heads)
    np.testing.assert_allclose(np.asarray(out), np.asarray(ref),
                               rtol=5e-2, atol=5e-2)

    print("KERNEL_OK")
</pallas_src>

<mosaic_0001>
module attributes {stable_mosaic.version = 11 : i64} {
  func.func @_qkv_proj_kernel(%arg0: i32, %arg1: i32, %arg2: i32, %arg3: memref<1x8x32xf32, #tpu.memory_space<vmem>>, %arg4: memref<32x96xbf16, #tpu.memory_space<vmem>>, %arg5: memref<1x96xf32, #tpu.memory_space<vmem>>, %arg6: memref<1x8x96xbf16, #tpu.memory_space<vmem>>) attributes {dimension_semantics = [#tpu.dimension_semantics<parallel>, #tpu.dimension_semantics<parallel>, #tpu.dimension_semantics<arbitrary>], iteration_bounds = array<i64: 2, 1, 1>, scalar_prefetch = 0 : i64, scratch_operands = 0 : i64, tpu.core_type = #tpu.core_type<tc>, window_params = [{transform_indices = @transform_0, window_bounds = array<i64: 1, 8, 32>}, {transform_indices = @transform_1, window_bounds = array<i64: 32, 96>}, {transform_indices = @transform_2, window_bounds = array<i64: 1, 96>}, {transform_indices = @transform_3, window_bounds = array<i64: 1, 8, 96>}]} {
    %c0 = arith.constant 0 : index
    %c0_0 = arith.constant 0 : index
    %c0_1 = arith.constant 0 : index
    %0 = vector.load %arg3[%c0, %c0_0, %c0_1] : memref<1x8x32xf32, #tpu.memory_space<vmem>>, vector<1x8x32xf32>
    %1 = vector.shape_cast %0 : vector<1x8x32xf32> to vector<8x32xf32>
    %2 = arith.truncf %1 : vector<8x32xf32> to vector<8x32xbf16>
    %c0_2 = arith.constant 0 : index
    %c0_3 = arith.constant 0 : index
    %3 = vector.load %arg4[%c0_2, %c0_3] : memref<32x96xbf16, #tpu.memory_space<vmem>>, vector<32x96xbf16>
    %cst = arith.constant dense<0.000000e+00> : vector<8x96xf32>
    %4 = tpu.matmul %2, %3, %cst {dimension_numbers = #tpu.dot_dimension_numbers<[1], [0], [0], [1], [0, 0, 1, 1], [], []>} : vector<8x32xbf16>, vector<32x96xbf16>, vector<8x96xf32> -> vector<8x96xf32>
    %c0_4 = arith.constant 0 : index
    %c0_5 = arith.constant 0 : index
    %5 = vector.load %arg5[%c0_4, %c0_5] : memref<1x96xf32, #tpu.memory_space<vmem>>, vector<1x96xf32>
    %6 = vector.broadcast %5 : vector<1x96xf32> to vector<8x96xf32>
    %7 = arith.addf %4, %6 : vector<8x96xf32>
    %8 = arith.truncf %7 : vector<8x96xf32> to vector<8x96xbf16>
    %c0_6 = arith.constant 0 : index
    %c0_7 = arith.constant 0 : index
    %c0_8 = arith.constant 0 : index
    %9 = vector.load %arg6[%c0_6, %c0_7, %c0_8] : memref<1x8x96xbf16, #tpu.memory_space<vmem>>, vector<1x8x96xbf16>
    %10 = vector.shape_cast %9 : vector<1x8x96xbf16> to vector<8x96xbf16>
    %11 = vector.shape_cast %8 : vector<8x96xbf16> to vector<1x8x96xbf16>
    tpu.vector_store %arg6[%c0_6, %c0_7, %c0_8], %11 {strides = array<i32>} : memref<1x8x96xbf16, #tpu.memory_space<vmem>>, vector<1x8x96xbf16>,
    return
  }
  func.func @transform_0(%arg0: i32, %arg1: i32, %arg2: i32) -> (i32, i32, i32) {
    %c0_i32 = arith.constant 0 : i32
    %c0_i32_0 = arith.constant 0 : i32
    return %arg0, %arg1, %c0_i32 : i32, i32, i32
  }
  func.func @transform_1(%arg0: i32, %arg1: i32, %arg2: i32) -> (i32, i32) {
    %c0_i32 = arith.constant 0 : i32
    %c0_i32_0 = arith.constant 0 : i32
    return %c0_i32, %arg2 : i32, i32
  }
  func.func @transform_2(%arg0: i32, %arg1: i32, %arg2: i32) -> (i32, i32) {
    %c0_i32 = arith.constant 0 : i32
    %c0_i32_0 = arith.constant 0 : i32
    return %c0_i32, %arg2 : i32, i32
  }
  func.func @transform_3(%arg0: i32, %arg1: i32, %arg2: i32) -> (i32, i32, i32) {
    %c0_i32 = arith.constant 0 : i32
    return %arg0, %arg1, %arg2 : i32, i32, i32
  }
}

</mosaic_0001>

<llo_original>
// kernel: tpu_custom_call.1
$region0: #{tpu_custom_call.1}
  #allocation0 [shape = 'u32[]', space=smem, size = 0x4, offset = 0x4, fixed_abs, tag = 'smem constant byte address 0x4 - core index']
  #allocation1 [shape = 'u32[144,128]{1,0:T(1,128)}', space=vmem, size = 0x12000, scoped, tag = 'internal scratch']
  %s0 = inlined_call_operand.hbm [shape: f32[2,8,32], index: 0, kind: input, shape index: {}]
  %s1 = inlined_call_operand.hbm [shape: bf16[32,96], index: 1, kind: input, shape index: {}]
  %s2 = inlined_call_operand.vmem [shape: f32[1,96], index: 2, kind: input, shape index: {}]
  %s3 = inlined_call_operand.hbm [shape: bf16[2,8,96], index: 3, kind: output, shape index: {}]
  %s4 = sld [smem:[#allocation0]]
  $region53: #{tpu_custom_call.1} parent=0
    _
  %s6 = ssub.s32 1, %s4
  %s7 = scalar_select 0, %s6, %s4
  $region1: #{tpu_custom_call.1} parent=0
    #allocation2 [shape = 'u8[8192]{0}', space=vmem, size = 0x2000, scoped, tag = 'input window, operand 0']
    #allocation3 [shape = 's32[2]{0}', space=sflag, size = 0x8, scoped, tag = 'scoped memory for tpu_custom_call.1']
    #allocation4 [shape = 's32[2]{0}', space=sflag, size = 0x8, scoped, tag = 'scoped memory for tpu_custom_call.1']
    #allocation5 [shape = 'u8[8192]{0}', space=vmem, size = 0x2000, scoped, tag = 'input window, operand 1, single buffered']
    #allocation6 [shape = 's32[1]{0}', space=sflag, size = 0x4, scoped, tag = 'scoped memory for tpu_custom_call.1']
    #allocation7 [shape = 'u8[4096]{0}', space=vmem, size = 0x1000, scoped, tag = 'output window, operand 0']
    %8 = vsyncpa [#allocation3], 0
    %s9 = scalar_lea.sflag [#allocation3], 1
    %10 = vsyncpa %s9, 0
    %11 = vsyncpa [#allocation6], 0
    %12 = vsyncpa [#allocation4], 0
    %s13 = scalar_lea.sflag [#allocation4], 1
    %14 = vsyncpa %s13, 0
    loop: start=0, step=1, limit=4
    $region2: #{tpu_custom_call.1} parent=1 // loop_pre_header
      _
    $region3: #{tpu_custom_call.1} parent=1 // loop_header
      %s16 = sphi 0, %s20
      %p17 = scmp.ge.s32.totalorder %s16, 4
      %s23 = sphi 0, %s42
      %s24 = sphi 0, %s38
      %s25 = sphi 0, %s34
      %s26 = sphi 0, %s23
      %s27 = sphi 0, %s24
      %s28 = sphi 0, %s25
      %s29 = sphi 0, %s26
      %s30 = sphi 0, %s27
      %s31 = sphi 0, %s28
      %s47 = sphi 0, %s49
      %s50 = sphi 0, %s47
      %s51 = sphi 0, %s50
      %s67 = sphi 0, %s51
      %s73 = sphi 0, %s75
      %s76 = sphi 0, %s73
      %s77 = sphi 0, %s76
      %s93 = sphi 0, %s77
      %s99 = sphi 0, %s101
      %s102 = sphi 0, %s99
      %s103 = sphi 0, %s102
      %s119 = sphi 0, %s103
      %s129 = sphi 0, %s131
      %s132 = sphi 0, %s129
      %s133 = sphi 0, %s132
      %s149 = sphi 0, %s133
    $region4: #{tpu_custom_call.1} parent=1 // loop_header_branch
      %19 = sbr.rel (%p17) target = $region8
    $region5: #{tpu_custom_call.1} parent=1 // loop_body
      %s21 = ssub.s32 %s16, 1
      %s22 = ssub.s32 %s16, 2
      %s32 = sadd.s32 1, %s25
      %p33 = scmp.ge.s32.totalorder %s32, 1
      %s34 = scalar_select %p33, 0, %s32
      %s35 = sadd.s32 1, %s24
      %s36 = scalar_select %p33, %s35, %s24
      %p37 = scmp.ge.s32.totalorder %s36, 1
      %s38 = scalar_select %p37, 0, %s36
      %s39 = sadd.s32 1, %s23
      %s40 = scalar_select %p37, %s39, %s23
      %p41 = scmp.ge.s32.totalorder %s40, 2
      %s42 = scalar_select %p41, 0, %s40
      %s43 = ssub.s32 %s23, %s42
      %s44 = ssub.s32 %s24, %s38
      %s45 = sor.u32 %s43, %s44
      %p46 = scmp.eq.s32.totalorder %s45, 0
      %s48 = sadd.s32 %s47, 1
      %s49 = scalar_select %p46, %s47, %s48
      %p52 = pneg %p46
      %p53 = scmp.eq.s32.totalorder %s16, 1
      %p54 = por %p52, %p53
      %p55 = scmp.ne.s32.totalorder %s47, %s50
      %p56 = scmp.eq.s32.totalorder %s16, 0
      %p57 = por %p55, %p56
      %p58 = scmp.ne.s32.totalorder %s47, %s50
      %p59 = scmp.eq.s32.totalorder %s21, 1
      %p60 = por %p58, %p59
      %p61 = scmp.ne.s32.totalorder %s50, %s51
      %p62 = scmp.eq.s32.totalorder %s21, 0
      %p63 = por %p61, %p62
      %p64 = scmp.ne.s32.totalorder %s50, %s51
      %p65 = scmp.eq.s32.totalorder %s22, 1
      %p66 = por %p64, %p65
      %p68 = scmp.ne.s32.totalorder %s51, %s67
      %p69 = scmp.eq.s32.totalorder %s22, 0
      %p70 = por %p68, %p69
      %s71 = ssub.s32 %s25, %s34
      %p72 = scmp.eq.s32.totalorder %s71, 0
      %s74 = sadd.s32 %s73, 1
      %s75 = scalar_select %p72, %s73, %s74
      %p78 = pneg %p72
      %p79 = scmp.eq.s32.totalorder %s16, 1
      %p80 = por %p78, %p79
      %p81 = scmp.ne.s32.totalorder %s73, %s76
      %p82 = scmp.eq.s32.totalorder %s16, 0
      %p83 = por %p81, %p82
      %p84 = scmp.ne.s32.totalorder %s73, %s76
      %p85 = scmp.eq.s32.totalorder %s21, 1
      %p86 = por %p84, %p85
      %p87 = scmp.ne.s32.totalorder %s76, %s77
      %p88 = scmp.eq.s32.totalorder %s21, 0
      %p89 = por %p87, %p88
      %p90 = scmp.ne.s32.totalorder %s76, %s77
      %p91 = scmp.eq.s32.totalorder %s22, 1
      %p92 = por %p90, %p91
      %p94 = scmp.ne.s32.totalorder %s77, %s93
      %p95 = scmp.eq.s32.totalorder %s22, 0
      %p96 = por %p94, %p95
      %s97 = ssub.s32 %s25, %s34
      %p98 = scmp.eq.s32.totalorder %s97, 0
      %s100 = sadd.s32 %s99, 1
      %s101 = scalar_select %p98, %s99, %s100
      %p104 = pneg %p98
      %p105 = scmp.eq.s32.totalorder %s16, 1
      %p106 = por %p104, %p105
      %p107 = scmp.ne.s32.totalorder %s99, %s102
      %p108 = scmp.eq.s32.totalorder %s16, 0
      %p109 = por %p107, %p108
      %p110 = scmp.ne.s32.totalorder %s99, %s102
      %p111 = scmp.eq.s32.totalorder %s21, 1
      %p112 = por %p110, %p111
      %p113 = scmp.ne.s32.totalorder %s102, %s103
      %p114 = scmp.eq.s32.totalorder %s21, 0
      %p115 = por %p113, %p114
      %p116 = scmp.ne.s32.totalorder %s102, %s103
      %p117 = scmp.eq.s32.totalorder %s22, 1
      %p118 = por %p116, %p117
      %p120 = scmp.ne.s32.totalorder %s103, %s119
      %p121 = scmp.eq.s32.totalorder %s22, 0
      %p122 = por %p120, %p121
      %s123 = ssub.s32 %s23, %s42
      %s124 = ssub.s32 %s24, %s38
      %s125 = sor.u32 %s123, %s124
      %s126 = ssub.s32 %s25, %s34
      %s127 = sor.u32 %s125, %s126
      %p128 = scmp.eq.s32.totalorder %s127, 0
      %s130 = sadd.s32 %s129, 1
      %s131 = scalar_select %p128, %s129, %s130
      %p134 = pneg %p128
      %p135 = scmp.eq.s32.totalorder %s16, 1
      %p136 = por %p134, %p135
      %p137 = scmp.ne.s32.totalorder %s129, %s132
      %p138 = scmp.eq.s32.totalorder %s16, 0
      %p139 = por %p137, %p138
      %p140 = scmp.ne.s32.totalorder %s129, %s132
      %p141 = scmp.eq.s32.totalorder %s21, 1
      %p142 = por %p140, %p141
      %p143 = scmp.ne.s32.totalorder %s132, %s133
      %p144 = scmp.eq.s32.totalorder %s21, 0
      %p145 = por %p143, %p144
      %p146 = scmp.ne.s32.totalorder %s132, %s133
      %p147 = scmp.eq.s32.totalorder %s22, 1
      %p148 = por %p146, %p147
      %p150 = scmp.ne.s32.totalorder %s133, %s149
      %p151 = scmp.eq.s32.totalorder %s22, 0
      %p152 = por %p150, %p151
      %p153 = scmp.le.s32.totalorder 1, %s16
      %p154 = scmp.lt.s32.totalorder %s16, 3
      %p155 = pnand %p153, %p154
      %p156 = pneg %p155
      // Predicated region
      $region9: #{tpu_custom_call.1} parent=5 // pred_check
        _
      $region10: #{tpu_custom_call.1} parent=5 // pred_check_branch
        %158 = sbr.rel (%p155) target = $region12
      $region11: #{tpu_custom_call.1} parent=5 // pred_region
        %s159 = ssub.s32 %s16, 1
        // Predicated region
        $region13: #{tpu_custom_call.1} parent=11 // pred_check
          %p160 = pneg %p89
        $region14: #{tpu_custom_call.1} parent=11 // pred_check_branch
          %162 = sbr.rel (%p160) target = $region16
        $region15: #{tpu_custom_call.1} parent=11 // pred_region
          %s164 = ssub.s32 256, 256
          %165 = vsyncadd [#allocation6], %s164
          %s166 = smul.addr %s28, 64
          %s167 = scalar_lea.hbm %s1, %s166
          %s168 = sshll.u32 [#allocation5], 4
          %s169 = int_to_ptr.vmem [resolvable:$true] %s168
          %174 = dma.hbm_to_vmem [thread:$0]  %s167, 256, %s169, [#allocation6], 64, 64, 4
        $region16: #{tpu_custom_call.1} parent=11 // pred_fallthru
          _
        // Predicated region
        $region17: #{tpu_custom_call.1} parent=11 // pred_check
          %p175 = pneg %p115
        $region18: #{tpu_custom_call.1} parent=11 // pred_check_branch
          %177 = sbr.rel (%p175) target = $region20
        $region19: #{tpu_custom_call.1} parent=11 // pred_region
          %p178 = scmp.lt.s32.totalorder %s28, 0
          %s179 = scalar_select %p178, %s28, 0
          %s180 = scalar_lea.vmem %s2, %s179
        $region20: #{tpu_custom_call.1} parent=11 // pred_fallthru
          _
      $region12: #{tpu_custom_call.1} parent=5 // pred_fallthru
        _
      %p181 = scmp.lt.s32.totalorder %s16, 2
      // Predicated region
      $region21: #{tpu_custom_call.1} parent=5 // pred_check
        %p182 = pneg %p181
      $region22: #{tpu_custom_call.1} parent=5 // pred_check_branch
        %184 = sbr.rel (%p182) target = $region24
      $region23: #{tpu_custom_call.1} parent=5 // pred_region
        // Predicated region
        $region25: #{tpu_custom_call.1} parent=23 // pred_check
          %p185 = pneg %p57
        $region26: #{tpu_custom_call.1} parent=23 // pred_check_branch
          %187 = sbr.rel (%p185) target = $region28
        $region27: #{tpu_custom_call.1} parent=23 // pred_region
          %s188 = sand.u32 %s47, 1
          %s189 = scalar_lea.sflag [#allocation3], %s188
          %s190 = sand.u32 %s47, 1
          %s191 = smul.addr %s190, 8
          %s192 = scalar_lea.vmem [#allocation2], %s191
          %s194 = ssub.s32 128, 128
          %195 = vsyncadd %s189, %s194
          %s196 = sadd.s32 %s24, %s23
          %s197 = smul.addr %s196, 128
          %s198 = scalar_lea.hbm %s0, %s197
          %s200 = sshll.u32 %s192, 4
          %s201 = int_to_ptr.vmem [resolvable:$true] %s200
          %203 = dma.hbm_to_vmem [thread:$0]  %s198, 128, %s201, %s189
        $region28: #{tpu_custom_call.1} parent=23 // pred_fallthru
          _
      $region24: #{tpu_custom_call.1} parent=5 // pred_fallthru
        _
      %p204 = scmp.le.s32.totalorder 1, %s16
      %p205 = scmp.lt.s32.totalorder %s16, 3
      %p206 = pnand %p204, %p205
      %p207 = pneg %p206
      // Predicated region
      $region29: #{tpu_custom_call.1} parent=5 // pred_check
        _
      $region30: #{tpu_custom_call.1} parent=5 // pred_check_branch
        %209 = sbr.rel (%p206) target = $region32
      $region31: #{tpu_custom_call.1} parent=5 // pred_region
        %s210 = ssub.s32 %s16, 1
        %s211 = sand.u32 %s50, 1
        %s212 = scalar_lea.sflag [#allocation3], %s211
        %s213 = sand.u32 %s50, 1
        %s214 = smul.addr %s213, 8
        %s215 = scalar_lea.vmem [#allocation2], %s214
        // Predicated region
        $region33: #{tpu_custom_call.1} parent=31 // pred_check
          %p216 = pneg %p63
        $region34: #{tpu_custom_call.1} parent=31 // pred_check_branch
          %218 = sbr.rel (%p216) target = $region36
        $region35: #{tpu_custom_call.1} parent=31 // pred_region
          %219 = dma.done %s212, 128
        $region36: #{tpu_custom_call.1} parent=31 // pred_fallthru
          _
        // Predicated region
        $region37: #{tpu_custom_call.1} parent=31 // pred_check
          %p220 = pneg %p89
        $region38: #{tpu_custom_call.1} parent=31 // pred_check_branch
          %222 = sbr.rel (%p220) target = $region40
        $region39: #{tpu_custom_call.1} parent=31 // pred_region
          %223 = dma.done [#allocation6], 256
        $region40: #{tpu_custom_call.1} parent=31 // pred_fallthru
          _
        %s224 = sand.u32 %s50, 1
        %s225 = scalar_lea.sflag [#allocation3], %s224
        %s226 = sand.u32 %s50, 1
        %s227 = smul.addr %s226, 8
        %s228 = scalar_lea.vmem [#allocation2], %s227
        %p229 = pneg %p63
        %p230 = pneg %p60
        %p231 = pneg %p89
        %p232 = pneg %p86
        %p233 = scmp.lt.s32.totalorder %s28, 0
        %s234 = scalar_select %p233, %s28, 0
        %s235 = scalar_lea.vmem %s2, %s234
        %p236 = pneg %p115
        %p237 = pneg %p112
        %p238 = pneg %p145
        %p239 = pneg %p142
        %s240 = sand.u32 %s132, 1
        %s241 = scalar_lea.sflag [#allocation4], %s240
        %s242 = sand.u32 %s132, 1
        %s243 = smul.addr %s242, 4
        %s244 = scalar_lea.vmem [#allocation7], %s243
        %p245 = scmp.lt.s32.totalorder %s28, 0
        %s246 = scalar_select %p245, %s28, 0
        %s247 = scalar_lea.vmem %s2, %s246
        %v249 = vld [vmem:[%s215] sm:$0xff]
        %v250 = vpack.c.bf16 %v249, %v249
        %v251 = vld [vmem:[#allocation5] sm:$0xf]
        %v252 = vld [vmem:[#allocation5 + $0x4] sm:$0xf]
        %v253 = vld [vmem:[#allocation5 + $0x8] sm:$0xf]
        %v254 = vld [vmem:[#allocation5 + $0xc] sm:$0xf]
        %v255 = vld [vmem:[%s247] sm:$0x1]
        %v257 = vlaneseq
        %v258 = vshrl.u32 %v257, 7
        %v259 = vsub.s32 0, %v258
        %v260 = vrot.slane %v255, %v259
        %v266 = vunpack.c.l.b16 %v251
        %v267 = vunpack.c.l.b16 %v252
        %v268 = vunpack.c.l.b16 %v253
        %v269 = vunpack.c.l.b16 %v254
        %v270 = vpack.c.b16 %v267, %v266
        %v271 = vpack.c.b16 %v269, %v268
        %vm274 = vcmask 261120
        %v276 = vsel %vm274, %v250, 0
        %278 = vmatprep.subr.bf16.mxu0 0
        %279 = vmatpush1.bf16.msra.mxu0 %v270
        %280 = vmatprep.subr.bf16.mxu0 0
        %281 = vmatpush1.bf16.msra.mxu0 %v271
        %282 = vmatprep.subr.bf16.mxu0 0
        %283 = vmatpush1.bf16.msra.mxu0 0
        %284 = vmatprep.subr.bf16.mxu0 0
        %285 = vmatpush1.bf16.msra.mxu0 0
        %286 = vmatprep.subr.bf16.mxu0 0
        %287 = vmatpush1.bf16.msra.mxu0 0
        %288 = vmatprep.subr.bf16.mxu0 0
        %289 = vmatpush1.bf16.msra.mxu0 0
        %290 = vmatprep.subr.bf16.mxu0 0
        %291 = vmatpush1.bf16.msra.mxu0 0
        %292 = vmatprep.subr.bf16.mxu0 0
        %293 = vmatpush1.bf16.msra.mxu0 0
        %294 = vmatprep.subr.bf16.mxu0 0
        %295 = vmatpush1.bf16.msra.mxu0 0
        %296 = vmatprep.subr.bf16.mxu0 0
        %297 = vmatpush1.bf16.msra.mxu0 0
        %298 = vmatprep.subr.bf16.mxu0 0
        %299 = vmatpush1.bf16.msra.mxu0 0
        %300 = vmatprep.subr.bf16.mxu0 0
        %301 = vmatpush1.bf16.msra.mxu0 0
        %302 = vmatprep.subr.bf16.mxu0 0
        %303 = vmatpush1.bf16.msra.mxu0 0
        %304 = vmatprep.subr.bf16.mxu0 0
        %305 = vmatpush1.bf16.msra.mxu0 0
        %306 = vmatprep.subr.bf16.mxu0 0
        %307 = vmatpush1.bf16.msra.mxu0 0
        %308 = vmatprep.subr.bf16.mxu0 0
        %309 = vmatpush1.bf16.msra.mxu0 0
        %310 = vmatprep.mubr.bf16.mxu0 0
        %311 = vmatmul.mubr.bf16.gmra.mrb[0].mxu0 %v276
        %v312 = vpop.f32.mrb[0].mxu0
        %v313 = vadd.f32 %v260, %v312
        %v314 = vpop.f32.mrb[0].mxu0
        %v315 = vpop.f32.mrb[0].mxu0
        %v316 = vpop.f32.mrb[0].mxu0
        %317 = vdwg.mxu0
        %v318 = vpack.c.bf16 %v313, %v313
        %vm319 = vcmask 781312
        %320 = vst.msk [vmem:[%s244] sm:$0xf] %vm319, %v318
        %s321 = sand.u32 %s132, 1
        %s322 = scalar_lea.sflag [#allocation4], %s321
        %s323 = sand.u32 %s132, 1
        %s324 = smul.addr %s323, 4
        %s325 = scalar_lea.vmem [#allocation7], %s324
        // Predicated region
        $region41: #{tpu_custom_call.1} parent=31 // pred_check
          %p326 = pneg %p142
        $region42: #{tpu_custom_call.1} parent=31 // pred_check_branch
          %328 = sbr.rel (%p326) target = $region44
        $region43: #{tpu_custom_call.1} parent=31 // pred_region
          %s330 = ssub.s32 64, 64
          %331 = vsyncadd %s322, %s330
          %s332 = sadd.s32 %s28, %s27
          %s333 = sadd.s32 %s332, %s26
          %s334 = smul.addr %s333, 64
          %s335 = scalar_lea.hbm %s3, %s334
          %s337 = sshll.u32 %s325, 4
          %s338 = int_to_ptr.vmem [resolvable:$true] %s337
          %340 = dma.vmem_to_hbm [thread:$0]  %s338, 64, %s335, %s322
        $region44: #{tpu_custom_call.1} parent=31 // pred_fallthru
          _
      $region32: #{tpu_custom_call.1} parent=5 // pred_fallthru
        _
      %p341 = scmp.le.s32.totalorder 2, %s16
      // Predicated region
      $region45: #{tpu_custom_call.1} parent=5 // pred_check
        %p342 = pneg %p341
      $region46: #{tpu_custom_call.1} parent=5 // pred_check_branch
        %344 = sbr.rel (%p342) target = $region48
      $region47: #{tpu_custom_call.1} parent=5 // pred_region
        %s345 = ssub.s32 %s16, 2
        // Predicated region
        $region49: #{tpu_custom_call.1} parent=47 // pred_check
          %p346 = pneg %p148
        $region50: #{tpu_custom_call.1} parent=47 // pred_check_branch
          %348 = sbr.rel (%p346) target = $region52
        $region51: #{tpu_custom_call.1} parent=47 // pred_region
          %s349 = sand.u32 %s133, 1
          %s350 = scalar_lea.sflag [#allocation4], %s349
          %s351 = sand.u32 %s133, 1
          %s352 = smul.addr %s351, 4
          %s353 = scalar_lea.vmem [#allocation7], %s352
          %354 = dma.done %s350, 64
        $region52: #{tpu_custom_call.1} parent=47 // pred_fallthru
          _
      $region48: #{tpu_custom_call.1} parent=5 // pred_fallthru
        _
    $region6: #{tpu_custom_call.1} parent=1 // loop_footer
      %s20 = sadd.s32 1, %s16
    $region7: #{tpu_custom_call.1} parent=1 // loop_footer_branch
      %15 = sbr.rel target = $region3
    $region8: #{tpu_custom_call.1} parent=1 // loop_exit
      _
    %355 = vsyncpa [#allocation3], 1
    %s356 = scalar_lea.sflag [#allocation3], 1
    %357 = vsyncpa %s356, 1
    %358 = vsyncpa [#allocation6], 1
    %359 = vsyncpa [#allocation4], 1
    %s360 = scalar_lea.sflag [#allocation4], 1
    %361 = vsyncpa %s360, 1

</llo_original>
